<compile_context>
chip_gen: v7x
topology: tpu7x:2x2x1
jax: 0.10.0
libtpu: 0.0.40
codegen_flags: <defaults>
</compile_context>

<pallas_src>
import functools

import jax
import jax.numpy as jnp
from jax.experimental import pallas as pl
from jax.experimental.pallas import tpu as pltpu

_MIB = 1 << 20


def _apply_association_kernel(feat_ref, assoc_ref, out_ref, *, Li, C, Lo):
    # feat_ref : (1, Li*C,  tHW)  -- all input layers & channels, one HW tile
    # assoc_ref: (1, Lo*Li, tHW)  -- all output layers' weights, one HW tile
    # out_ref  : (1, Lo*C,  tHW)  -- all output layers, one HW tile
    for lo in range(Lo):
        # Upcast BEFORE adding eps so bf16 inputs don't lose the 1e-6 guard.
        a = assoc_ref[0, lo * Li:(lo + 1) * Li].astype(jnp.float32) + 1e-6  # (Li, tHW)
        denom = jnp.sum(a, axis=0, keepdims=True)                           # (1, tHW)

        # Unrolled accumulate over Li: (1, tHW) weight row sublane-broadcast
        # over the (C, tHW) channel slab of input layer li.
        acc = a[0:1, :] * feat_ref[0, 0:C].astype(jnp.float32)              # (C, tHW)
        for li in range(1, Li):
            acc = acc + a[li:li + 1, :] * feat_ref[0, li * C:(li + 1) * C].astype(jnp.float32)

        # Factor the normalisation out: sum_li (s/d)*f == (1/d) * sum_li s*f.
        # Exact division on a single (1, tHW) row (kept exact for 1e-5 parity).
        inv = 1.0 / denom                                                   # (1, tHW)
        out_ref[0, lo * C:(lo + 1) * C] = (acc * inv).astype(out_ref.dtype)


def _padded_block_bytes(block_shape, itemsize):
    """VMEM footprint of a block, accounting for (8, 128) sublane/lane padding."""
    *lead, sub, lane = block_shape
    sub_p = ((sub + 7) // 8) * 8
    lane_p = ((lane + 127) // 128) * 128
    n = itemsize * sub_p * lane_p
    for d in lead:
        n *= d
    return n


def _vmem_capacity_bytes():
    """Physical VMEM of the current TPU generation (conservative fallback)."""
    try:
        info = pltpu.get_tpu_info()
        cap = getattr(info, "vmem_capacity_bytes", None)
        if cap:
            return int(cap)
    except Exception:
        pass
    return 64 * _MIB  # v7x-sized conservative default


def apply_association(feat, assoc, *, tile_hw=None):
    """Pallas wrapper. feat: (B, Li, C, H, W); assoc: (B, Lo, Li, H, W)."""
    B, Li, C, H, W = feat.shape
    Bo, Lo, Li2, H2, W2 = assoc.shape
    assert (B, Li, H, W) == (Bo, Li2, H2, W2)
    HW = H * W

    feat_isz = jnp.dtype(feat.dtype).itemsize
    assoc_isz = jnp.dtype(assoc.dtype).itemsize

    def blocks_bytes(t):
        fb = _padded_block_bytes((1, Li * C, t), feat_isz)
        ab = _padded_block_bytes((1, Lo * Li, t), assoc_isz)
        ob = _padded_block_bytes((1, Lo * C, t), feat_isz)
        return 2 * (fb + ab + ob)  # double-buffered

    # Generation-aware budget: be generous on v5e/v6e (128 MiB VMEM), careful on
    # v7x (64 MiB) so compiler scratch + the fat Lo-folded blocks still fit.
    vmem_cap = _vmem_capacity_bytes()
    if vmem_cap >= 96 * _MIB:           # v5e / v6e class
        vmem_budget = 56 * _MIB
        vmem_limit_cap = vmem_cap - 32 * _MIB
    else:                               # v7x class
        vmem_budget = 26 * _MIB
        vmem_limit_cap = 40 * _MIB

    if tile_hw is None:
        candidates = [t for t in (16384, 8192, 4096, 2048, 1024, 512, 256, 128)
                      if HW % t == 0]
        tile_hw = None
        for t in candidates:
            if blocks_bytes(t) <= vmem_budget:
                tile_hw = t
                break
        if tile_hw is None:
            # Either HW isn't a multiple of 128 (block must span the full dim),
            # or Li/Lo/C are so large that even 128 lanes overshoots the budget.
            tile_hw = candidates[-1] if candidates else HW
    assert HW % tile_hw == 0, "spatial size must be a multiple of the HW tile"

    needed = blocks_bytes(tile_hw)
    vmem_limit = int(min(max(needed + 8 * _MIB, 32 * _MIB), vmem_limit_cap))
    # Fallback-path safety: never request less than what the live blocks need
    # (clamped just below physical so the compiler keeps some scratch headroom).
    vmem_limit = int(max(vmem_limit, min(needed + 4 * _MIB, vmem_cap - 8 * _MIB)))

    # Flatten layer/channel dims into the sublane axis, spatial into the lane axis.
    feat_f = feat.reshape(B, Li * C, HW)
    assoc_f = assoc.reshape(B, Lo * Li, HW)

    grid = (B, HW // tile_hw)
    kernel = functools.partial(_apply_association_kernel, Li=Li, C=C, Lo=Lo)

    out = pl.pallas_call(
        kernel,
        out_shape=jax.ShapeDtypeStruct((B, Lo * C, HW), feat.dtype),
        grid=grid,
        in_specs=[
            pl.BlockSpec((1, Li * C, tile_hw), lambda b, t: (b, 0, t)),
            pl.BlockSpec((1, Lo * Li, tile_hw), lambda b, t: (b, 0, t)),
        ],
        out_specs=pl.BlockSpec((1, Lo * C, tile_hw), lambda b, t: (b, 0, t)),
        compiler_params=pltpu.CompilerParams(
            # Both axes are fully independent; on v7x the megacore split lands on
            # B/HW (feat reuse across Lo is now inside the kernel body, so it can
            # never be duplicated across TensorCores).
            dimension_semantics=("parallel", "parallel"),
            vmem_limit_bytes=vmem_limit,
        ),
    )(feat_f, assoc_f)
    return out.reshape(B, Lo, C, H, W)


def _reference(feat, assoc):
    # Pure-JAX transcription of the PyTorch forward.
    safe = assoc.astype(jnp.float32) + 1e-6
    norm = safe / jnp.sum(safe, axis=2, keepdims=True)
    out = jnp.sum(feat.astype(jnp.float32)[:, None] * norm[:, :, :, None], axis=2)
    return out.astype(feat.dtype)


if __name__ == "__main__":
    # Small, deterministic shapes: B=2 batches, Li=4 input layers (num_layers),
    # Lo=4 output layers, C=4 channels, 16x16 spatial.
    B, Li, Lo, C, H, W = 2, 4, 4, 4, 16, 16
    key = jax.random.PRNGKey(0)
    kf, ka = jax.random.split(key)
    feat = jax.random.normal(kf, (B, Li, C, H, W), dtype=jnp.float32)
    assoc = jax.random.uniform(ka, (B, Lo, Li, H, W), dtype=jnp.float32)

    out = apply_association(feat, assoc)
    out = jax.block_until_ready(out)

    ref = _reference(feat, assoc)
    assert out.shape == (B, Lo, C, H, W)
    assert jnp.allclose(out, ref, atol=1e-5, rtol=1e-5), "mismatch vs reference"

    print("KERNEL_OK")
</pallas_src>

<mosaic_0001>
module attributes {stable_mosaic.version = 11 : i64} {
  func.func @_apply_association_kernel(%arg0: i32, %arg1: i32, %arg2: memref<1x16x256xf32, #tpu.memory_space<vmem>>, %arg3: memref<1x16x256xf32, #tpu.memory_space<vmem>>, %arg4: memref<1x16x256xf32, #tpu.memory_space<vmem>>) attributes {dimension_semantics = [#tpu.dimension_semantics<parallel>, #tpu.dimension_semantics<parallel>], iteration_bounds = array<i64: 2, 1>, scalar_prefetch = 0 : i64, scratch_operands = 0 : i64, tpu.core_type = #tpu.core_type<tc>, window_params = [{transform_indices = @transform_0, window_bounds = array<i64: 1, 16, 256>}, {transform_indices = @transform_1, window_bounds = array<i64: 1, 16, 256>}, {transform_indices = @transform_2, window_bounds = array<i64: 1, 16, 256>}]} {
    %c0 = arith.constant 0 : index
    %c0_0 = arith.constant 0 : index
    %c0_1 = arith.constant 0 : index
    %0 = vector.load %arg3[%c0, %c0_0, %c0_1] : memref<1x16x256xf32, #tpu.memory_space<vmem>>, vector<1x4x256xf32>
    %1 = vector.shape_cast %0 : vector<1x4x256xf32> to vector<4x256xf32>
    %cst = arith.constant 9.99999997E-7 : f32
    %2 = vector.broadcast %cst : f32 to vector<4x256xf32>
    %3 = arith.addf %1, %2 : vector<4x256xf32>
    %cst_2 = arith.constant dense<0.000000e+00> : vector<256xf32>
    %4 = vector.multi_reduction <add>, %3, %cst_2 [0] : vector<4x256xf32> to vector<256xf32>
    %5 = vector.shape_cast %4 : vector<256xf32> to vector<1x256xf32>
    %6 = vector.extract_strided_slice %3 {offsets = [0, 0], sizes = [1, 256], strides = [1, 1]} : vector<4x256xf32> to vector<1x256xf32>
    %c0_3 = arith.constant 0 : index
    %c0_4 = arith.constant 0 : index
    %c0_5 = arith.constant 0 : index
    %7 = vector.load %arg2[%c0_3, %c0_4, %c0_5] : memref<1x16x256xf32, #tpu.memory_space<vmem>>, vector<1x4x256xf32>
    %8 = vector.shape_cast %7 : vector<1x4x256xf32> to vector<4x256xf32>
    %9 = vector.broadcast %6 : vector<1x256xf32> to vector<4x256xf32>
    %10 = arith.mulf %9, %8 : vector<4x256xf32>
    %11 = vector.extract_strided_slice %3 {offsets = [1, 0], sizes = [1, 256], strides = [1, 1]} : vector<4x256xf32> to vector<1x256xf32>
    %c0_6 = arith.constant 0 : index
    %c4 = arith.constant 4 : index
    %c0_7 = arith.constant 0 : index
    %12 = vector.load %arg2[%c0_6, %c4, %c0_7] : memref<1x16x256xf32, #tpu.memory_space<vmem>>, vector<1x4x256xf32>
    %13 = vector.shape_cast %12 : vector<1x4x256xf32> to vector<4x256xf32>
    %14 = vector.broadcast %11 : vector<1x256xf32> to vector<4x256xf32>
    %15 = arith.mulf %14, %13 : vector<4x256xf32>
    %16 = arith.addf %10, %15 : vector<4x256xf32>
    %17 = vector.extract_strided_slice %3 {offsets = [2, 0], sizes = [1, 256], strides = [1, 1]} : vector<4x256xf32> to vector<1x256xf32>
    %c0_8 = arith.constant 0 : index
    %c8 = arith.constant 8 : index
    %c0_9 = arith.constant 0 : index
    %18 = vector.load %arg2[%c0_8, %c8, %c0_9] : memref<1x16x256xf32, #tpu.memory_space<vmem>>, vector<1x4x256xf32>
    %19 = vector.shape_cast %18 : vector<1x4x256xf32> to vector<4x256xf32>
    %20 = vector.broadcast %17 : vector<1x256xf32> to vector<4x256xf32>
    %21 = arith.mulf %20, %19 : vector<4x256xf32>
    %22 = arith.addf %16, %21 : vector<4x256xf32>
    %23 = vector.extract_strided_slice %3 {offsets = [3, 0], sizes = [1, 256], strides = [1, 1]} : vector<4x256xf32> to vector<1x256xf32>
    %c0_10 = arith.constant 0 : index
    %c12 = arith.constant 12 : index
    %c0_11 = arith.constant 0 : index
    %24 = vector.load %arg2[%c0_10, %c12, %c0_11] : memref<1x16x256xf32, #tpu.memory_space<vmem>>, vector<1x4x256xf32>
    %25 = vector.shape_cast %24 : vector<1x4x256xf32> to vector<4x256xf32>
    %26 = vector.broadcast %23 : vector<1x256xf32> to vector<4x256xf32>
    %27 = arith.mulf %26, %25 : vector<4x256xf32>
    %28 = arith.addf %22, %27 : vector<4x256xf32>
    %cst_12 = arith.constant 1.000000e+00 : f32
    %29 = vector.broadcast %cst_12 : f32 to vector<1x256xf32>
    %30 = arith.divf %29, %5 : vector<1x256xf32>
    %31 = vector.broadcast %30 : vector<1x256xf32> to vector<4x256xf32>
    %32 = arith.mulf %28, %31 : vector<4x256xf32>
    %c0_13 = arith.constant 0 : index
    %c0_14 = arith.constant 0 : index
    %c0_15 = arith.constant 0 : index
    %33 = vector.load %arg4[%c0_13, %c0_14, %c0_15] : memref<1x16x256xf32, #tpu.memory_space<vmem>>, vector<1x4x256xf32>
    %34 = vector.shape_cast %33 : vector<1x4x256xf32> to vector<4x256xf32>
    %35 = vector.shape_cast %32 : vector<4x256xf32> to vector<1x4x256xf32>
    tpu.vector_store %arg4[%c0_13, %c0_14, %c0_15], %35 {strides = array<i32>} : memref<1x16x256xf32, #tpu.memory_space<vmem>>, vector<1x4x256xf32>,
    %c0_16 = arith.constant 0 : index
    %c4_17 = arith.constant 4 : index
    %c0_18 = arith.constant 0 : index
    %36 = vector.load %arg3[%c0_16, %c4_17, %c0_18] : memref<1x16x256xf32, #tpu.memory_space<vmem>>, vector<1x4x256xf32>
    %37 = vector.shape_cast %36 : vector<1x4x256xf32> to vector<4x256xf32>
    %cst_19 = arith.constant 9.99999997E-7 : f32
    %38 = vector.broadcast %cst_19 : f32 to vector<4x256xf32>
    %39 = arith.addf %37, %38 : vector<4x256xf32>
    %cst_20 = arith.constant dense<0.000000e+00> : vector<256xf32>
    %40 = vector.multi_reduction <add>, %39, %cst_20 [0] : vector<4x256xf32> to vector<256xf32>
    %41 = vector.shape_cast %40 : vector<256xf32> to vector<1x256xf32>
    %42 = vector.extract_strided_slice %39 {offsets = [0, 0], sizes = [1, 256], strides = [1, 1]} : vector<4x256xf32> to vector<1x256xf32>
    %c0_21 = arith.constant 0 : index
    %c0_22 = arith.constant 0 : index
    %c0_23 = arith.constant 0 : index
    %43 = vector.load %arg2[%c0_21, %c0_22, %c0_23] : memref<1x16x256xf32, #tpu.memory_space<vmem>>, vector<1x4x256xf32>
    %44 = vector.shape_cast %43 : vector<1x4x256xf32> to vector<4x256xf32>
    %45 = vector.broadcast %42 : vector<1x256xf32> to vector<4x256xf32>
    %46 = arith.mulf %45, %44 : vector<4x256xf32>
    %47 = vector.extract_strided_slice %39 {offsets = [1, 0], sizes = [1, 256], strides = [1, 1]} : vector<4x256xf32> to vector<1x256xf32>
    %c0_24 = arith.constant 0 : index
    %c4_25 = arith.constant 4 : index
    %c0_26 = arith.constant 0 : index
    %48 = vector.load %arg2[%c0_24, %c4_25, %c0_26] : memref<1x16x256xf32, #tpu.memory_space<vmem>>, vector<1x4x256xf32>
    %49 = vector.shape_cast %48 : vector<1x4x256xf32> to vector<4x256xf32>
    %50 = vector.broadcast %47 : vector<1x256xf32> to vector<4x256xf32>
    %51 = arith.mulf %50, %49 : vector<4x256xf32>
    %52 = arith.addf %46, %51 : vector<4x256xf32>
    %53 = vector.extract_strided_slice %39 {offsets = [2, 0], sizes = [1, 256], strides = [1, 1]} : vector<4x256xf32> to vector<1x256xf32>
    %c0_27 = arith.constant 0 : index
    %c8_28 = arith.constant 8 : index
    %c0_29 = arith.constant 0 : index
    %54 = vector.load %arg2[%c0_27, %c8_28, %c0_29] : memref<1x16x256xf32, #tpu.memory_space<vmem>>, vector<1x4x256xf32>
    %55 = vector.shape_cast %54 : vector<1x4x256xf32> to vector<4x256xf32>
    %56 = vector.broadcast %53 : vector<1x256xf32> to vector<4x256xf32>
    %57 = arith.mulf %56, %55 : vector<4x256xf32>
    %58 = arith.addf %52, %57 : vector<4x256xf32>
    %59 = vector.extract_strided_slice %39 {offsets = [3, 0], sizes = [1, 256], strides = [1, 1]} : vector<4x256xf32> to vector<1x256xf32>
    %c0_30 = arith.constant 0 : index
    %c12_31 = arith.constant 12 : index
    %c0_32 = arith.constant 0 : index
    %60 = vector.load %arg2[%c0_30, %c12_31, %c0_32] : memref<1x16x256xf32, #tpu.memory_space<vmem>>, vector<1x4x256xf32>
    %61 = vector.shape_cast %60 : vector<1x4x256xf32> to vector<4x256xf32>
    %62 = vector.broadcast %59 : vector<1x256xf32> to vector<4x256xf32>
    %63 = arith.mulf %62, %61 : vector<4x256xf32>
    %64 = arith.addf %58, %63 : vector<4x256xf32>
    %cst_33 = arith.constant 1.000000e+00 : f32
    %65 = vector.broadcast %cst_33 : f32 to vector<1x256xf32>
    %66 = arith.divf %65, %41 : vector<1x256xf32>
    %67 = vector.broadcast %66 : vector<1x256xf32> to vector<4x256xf32>
    %68 = arith.mulf %64, %67 : vector<4x256xf32>
    %c0_34 = arith.constant 0 : index
    %c4_35 = arith.constant 4 : index
    %c0_36 = arith.constant 0 : index
    %69 = vector.load %arg4[%c0_34, %c4_35, %c0_36] : memref<1x16x256xf32, #tpu.memory_space<vmem>>, vector<1x4x256xf32>
    %70 = vector.shape_cast %69 : vector<1x4x256xf32> to vector<4x256xf32>
    %71 = vector.shape_cast %68 : vector<4x256xf32> to vector<1x4x256xf32>
    tpu.vector_store %arg4[%c0_34, %c4_35, %c0_36], %71 {strides = array<i32>} : memref<1x16x256xf32, #tpu.memory_space<vmem>>, vector<1x4x256xf32>,
    %c0_37 = arith.constant 0 : index
    %c8_38 = arith.constant 8 : index
    %c0_39 = arith.constant 0 : index
    %72 = vector.load %arg3[%c0_37, %c8_38, %c0_39] : memref<1x16x256xf32, #tpu.memory_space<vmem>>, vector<1x4x256xf32>
    %73 = vector.shape_cast %72 : vector<1x4x256xf32> to vector<4x256xf32>
    %cst_40 = arith.constant 9.99999997E-7 : f32
    %74 = vector.broadcast %cst_40 : f32 to vector<4x256xf32>
    %75 = arith.addf %73, %74 : vector<4x256xf32>
    %cst_41 = arith.constant dense<0.000000e+00> : vector<256xf32>
    %76 = vector.multi_reduction <add>, %75, %cst_41 [0] : vector<4x256xf32> to vector<256xf32>
    %77 = vector.shape_cast %76 : vector<256xf32> to vector<1x256xf32>
    %78 = vector.extract_strided_slice %75 {offsets = [0, 0], sizes = [1, 256], strides = [1, 1]} : vector<4x256xf32> to vector<1x256xf32>
    %c0_42 = arith.constant 0 : index
    %c0_43 = arith.constant 0 : index
    %c0_44 = arith.constant 0 : index
    %79 = vector.load %arg2[%c0_42, %c0_43, %c0_44] : memref<1x16x256xf32, #tpu.memory_space<vmem>>, vector<1x4x256xf32>
    %80 = vector.shape_cast %79 : vector<1x4x256xf32> to vector<4x256xf32>
    %81 = vector.broadcast %78 : vector<1x256xf32> to vector<4x256xf32>
    %82 = arith.mulf %81, %80 : vector<4x256xf32>
    %83 = vector.extract_strided_slice %75 {offsets = [1, 0], sizes = [1, 256], strides = [1, 1]} : vector<4x256xf32> to vector<1x256xf32>
    %c0_45 = arith.constant 0 : index
    %c4_46 = arith.constant 4 : index
    %c0_47 = arith.constant 0 : index
    %84 = vector.load %arg2[%c0_45, %c4_46, %c0_47] : memref<1x16x256xf32, #tpu.memory_space<vmem>>, vector<1x4x256xf32>
    %85 = vector.shape_cast %84 : vector<1x4x256xf32> to vector<4x256xf32>
    %86 = vector.broadcast %83 : vector<1x256xf32> to vector<4x256xf32>
    %87 = arith.mulf %86, %85 : vector<4x256xf32>
    %88 = arith.addf %82, %87 : vector<4x256xf32>
    %89 = vector.extract_strided_slice %75 {offsets = [2, 0], sizes = [1, 256], strides = [1, 1]} : vector<4x256xf32> to vector<1x256xf32>
    %c0_48 = arith.constant 0 : index
    %c8_49 = arith.constant 8 : index
    %c0_50 = arith.constant 0 : index
    %90 = vector.load %arg2[%c0_48, %c8_49, %c0_50] : memref<1x16x256xf32, #tpu.memory_space<vmem>>, vector<1x4x256xf32>
    %91 = vector.shape_cast %90 : vector<1x4x256xf32> to vector<4x256xf32>
    %92 = vector.broadcast %89 : vector<1x256xf32> to vector<4x256xf32>
    %93 = arith.mulf %92, %91 : vector<4x256xf32>
    %94 = arith.addf %88, %93 : vector<4x256xf32>
    %95 = vector.extract_strided_slice %75 {offsets = [3, 0], sizes = [1, 256], strides = [1, 1]} : vector<4x256xf32> to vector<1x256xf32>
    %c0_51 = arith.constant 0 : index
    %c12_52 = arith.constant 12 : index
    %c0_53 = arith.constant 0 : index
    %96 = vector.load %arg2[%c0_51, %c12_52, %c0_53] : memref<1x16x256xf32, #tpu.memory_space<vmem>>, vector<1x4x256xf32>
    %97 = vector.shape_cast %96 : vector<1x4x256xf32> to vector<4x256xf32>
    %98 = vector.broadcast %95 : vector<1x256xf32> to vector<4x256xf32>
    %99 = arith.mulf %98, %97 : vector<4x256xf32>
    %100 = arith.addf %94, %99 : vector<4x256xf32>
    %cst_54 = arith.constant 1.000000e+00 : f32
    %101 = vector.broadcast %cst_54 : f32 to vector<1x256xf32>
    %102 = arith.divf %101, %77 : vector<1x256xf32>
    %103 = vector.broadcast %102 : vector<1x256xf32> to vector<4x256xf32>
    %104 = arith.mulf %100, %103 : vector<4x256xf32>
    %c0_55 = arith.constant 0 : index
    %c8_56 = arith.constant 8 : index
    %c0_57 = arith.constant 0 : index
    %105 = vector.load %arg4[%c0_55, %c8_56, %c0_57] : memref<1x16x256xf32, #tpu.memory_space<vmem>>, vector<1x4x256xf32>
    %106 = vector.shape_cast %105 : vector<1x4x256xf32> to vector<4x256xf32>
    %107 = vector.shape_cast %104 : vector<4x256xf32> to vector<1x4x256xf32>
    tpu.vector_store %arg4[%c0_55, %c8_56, %c0_57], %107 {strides = array<i32>} : memref<1x16x256xf32, #tpu.memory_space<vmem>>, vector<1x4x256xf32>,
    %c0_58 = arith.constant 0 : index
    %c12_59 = arith.constant 12 : index
    %c0_60 = arith.constant 0 : index
    %108 = vector.load %arg3[%c0_58, %c12_59, %c0_60] : memref<1x16x256xf32, #tpu.memory_space<vmem>>, vector<1x4x256xf32>
    %109 = vector.shape_cast %108 : vector<1x4x256xf32> to vector<4x256xf32>
    %cst_61 = arith.constant 9.99999997E-7 : f32
    %110 = vector.broadcast %cst_61 : f32 to vector<4x256xf32>
    %111 = arith.addf %109, %110 : vector<4x256xf32>
    %cst_62 = arith.constant dense<0.000000e+00> : vector<256xf32>
    %112 = vector.multi_reduction <add>, %111, %cst_62 [0] : vector<4x256xf32> to vector<256xf32>
    %113 = vector.shape_cast %112 : vector<256xf32> to vector<1x256xf32>
    %114 = vector.extract_strided_slice %111 {offsets = [0, 0], sizes = [1, 256], strides = [1, 1]} : vector<4x256xf32> to vector<1x256xf32>
    %c0_63 = arith.constant 0 : index
    %c0_64 = arith.constant 0 : index
    %c0_65 = arith.constant 0 : index
    %115 = vector.load %arg2[%c0_63, %c0_64, %c0_65] : memref<1x16x256xf32, #tpu.memory_space<vmem>>, vector<1x4x256xf32>
    %116 = vector.shape_cast %115 : vector<1x4x256xf32> to vector<4x256xf32>
    %117 = vector.broadcast %114 : vector<1x256xf32> to vector<4x256xf32>
    %118 = arith.mulf %117, %116 : vector<4x256xf32>
    %119 = vector.extract_strided_slice %111 {offsets = [1, 0], sizes = [1, 256], strides = [1, 1]} : vector<4x256xf32> to vector<1x256xf32>
    %c0_66 = arith.constant 0 : index
    %c4_67 = arith.constant 4 : index
    %c0_68 = arith.constant 0 : index
    %120 = vector.load %arg2[%c0_66, %c4_67, %c0_68] : memref<1x16x256xf32, #tpu.memory_space<vmem>>, vector<1x4x256xf32>
    %121 = vector.shape_cast %120 : vector<1x4x256xf32> to vector<4x256xf32>
    %122 = vector.broadcast %119 : vector<1x256xf32> to vector<4x256xf32>
    %123 = arith.mulf %122, %121 : vector<4x256xf32>
    %124 = arith.addf %118, %123 : vector<4x256xf32>
    %125 = vector.extract_strided_slice %111 {offsets = [2, 0], sizes = [1, 256], strides = [1, 1]} : vector<4x256xf32> to vector<1x256xf32>
    %c0_69 = arith.constant 0 : index
    %c8_70 = arith.constant 8 : index
    %c0_71 = arith.constant 0 : index
    %126 = vector.load %arg2[%c0_69, %c8_70, %c0_71] : memref<1x16x256xf32, #tpu.memory_space<vmem>>, vector<1x4x256xf32>
    %127 = vector.shape_cast %126 : vector<1x4x256xf32> to vector<4x256xf32>
    %128 = vector.broadcast %125 : vector<1x256xf32> to vector<4x256xf32>
    %129 = arith.mulf %128, %127 : vector<4x256xf32>
    %130 = arith.addf %124, %129 : vector<4x256xf32>
    %131 = vector.extract_strided_slice %111 {offsets = [3, 0], sizes = [1, 256], strides = [1, 1]} : vector<4x256xf32> to vector<1x256xf32>
    %c0_72 = arith.constant 0 : index
    %c12_73 = arith.constant 12 : index
    %c0_74 = arith.constant 0 : index
    %132 = vector.load %arg2[%c0_72, %c12_73, %c0_74] : memref<1x16x256xf32, #tpu.memory_space<vmem>>, vector<1x4x256xf32>
    %133 = vector.shape_cast %132 : vector<1x4x256xf32> to vector<4x256xf32>
    %134 = vector.broadcast %131 : vector<1x256xf32> to vector<4x256xf32>
    %135 = arith.mulf %134, %133 : vector<4x256xf32>
    %136 = arith.addf %130, %135 : vector<4x256xf32>
    %cst_75 = arith.constant 1.000000e+00 : f32
    %137 = vector.broadcast %cst_75 : f32 to vector<1x256xf32>
    %138 = arith.divf %137, %113 : vector<1x256xf32>
    %139 = vector.broadcast %138 : vector<1x256xf32> to vector<4x256xf32>
    %140 = arith.mulf %136, %139 : vector<4x256xf32>
    %c0_76 = arith.constant 0 : index
    %c12_77 = arith.constant 12 : index
    %c0_78 = arith.constant 0 : index
    %141 = vector.load %arg4[%c0_76, %c12_77, %c0_78] : memref<1x16x256xf32, #tpu.memory_space<vmem>>, vector<1x4x256xf32>
    %142 = vector.shape_cast %141 : vector<1x4x256xf32> to vector<4x256xf32>
    %143 = vector.shape_cast %140 : vector<4x256xf32> to vector<1x4x256xf32>
    tpu.vector_store %arg4[%c0_76, %c12_77, %c0_78], %143 {strides = array<i32>} : memref<1x16x256xf32, #tpu.memory_space<vmem>>, vector<1x4x256xf32>,
    return
  }
  func.func @transform_0(%arg0: i32, %arg1: i32) -> (i32, i32, i32) {
    %c0_i32 = arith.constant 0 : i32
    %c0_i32_0 = arith.constant 0 : i32
    return %arg0, %c0_i32, %arg1 : i32, i32, i32
  }
  func.func @transform_1(%arg0: i32, %arg1: i32) -> (i32, i32, i32) {
    %c0_i32 = arith.constant 0 : i32
    %c0_i32_0 = arith.constant 0 : i32
    return %arg0, %c0_i32, %arg1 : i32, i32, i32
  }
  func.func @transform_2(%arg0: i32, %arg1: i32) -> (i32, i32, i32) {
    %c0_i32 = arith.constant 0 : i32
    %c0_i32_0 = arith.constant 0 : i32
    return %arg0, %c0_i32, %arg1 : i32, i32, i32
  }
}

</mosaic_0001>

<llo_original>
// kernel: tpu_custom_call.1
$region0: #{tpu_custom_call.1}
  #allocation0 [shape = 'u32[]', space=smem, size = 0x4, offset = 0x4, fixed_abs, tag = 'smem constant byte address 0x4 - core index']
  #allocation1 [shape = 'u32[144,128]{1,0:T(1,128)}', space=vmem, size = 0x12000, scoped, tag = 'internal scratch']
  %s0 = inlined_call_operand.hbm [shape: f32[2,16,256], index: 0, kind: input, shape index: {}]
  %s1 = inlined_call_operand.hbm [shape: f32[2,16,256], index: 1, kind: input, shape index: {}]
  %s2 = inlined_call_operand.hbm [shape: f32[2,16,256], index: 2, kind: output, shape index: {}]
  %s3 = sld [smem:[#allocation0]]
  $region49: #{tpu_custom_call.1} parent=0
    _
  %s5 = ssub.s32 1, %s3
  %s6 = scalar_select 0, %s5, %s3
  $region1: #{tpu_custom_call.1} parent=0
    #allocation2 [shape = 'u8[32768]{0}', space=vmem, size = 0x8000, scoped, tag = 'input window, operand 0']
    #allocation3 [shape = 's32[2]{0}', space=sflag, size = 0x8, scoped, tag = 'scoped memory for tpu_custom_call.1']
    #allocation4 [shape = 's32[2]{0}', space=sflag, size = 0x8, scoped, tag = 'scoped memory for tpu_custom_call.1']
    #allocation5 [shape = 'u8[32768]{0}', space=vmem, size = 0x8000, scoped, tag = 'input window, operand 1']
    #allocation6 [shape = 's32[2]{0}', space=sflag, size = 0x8, scoped, tag = 'scoped memory for tpu_custom_call.1']
    #allocation7 [shape = 'u8[32768]{0}', space=vmem, size = 0x8000, scoped, tag = 'output window, operand 0']
    %7 = vsyncpa [#allocation3], 0
    %s8 = scalar_lea.sflag [#allocation3], 1
    %9 = vsyncpa %s8, 0
    %10 = vsyncpa [#allocation6], 0
    %s11 = scalar_lea.sflag [#allocation6], 1
    %12 = vsyncpa %s11, 0
    %13 = vsyncpa [#allocation4], 0
    %s14 = scalar_lea.sflag [#allocation4], 1
    %15 = vsyncpa %s14, 0
    loop: start=0, step=1, limit=4
    $region2: #{tpu_custom_call.1} parent=1 // loop_pre_header
      _
    $region3: #{tpu_custom_call.1} parent=1 // loop_header
      %s17 = sphi 0, %s21
      %p18 = scmp.ge.s32.totalorder %s17, 4
      %s24 = sphi 0, %s36
      %s25 = sphi 0, %s32
      %s26 = sphi 0, %s24
      %s27 = sphi 0, %s25
      %s28 = sphi 0, %s26
      %s29 = sphi 0, %s27
      %s41 = sphi 0, %s43
      %s44 = sphi 0, %s41
      %s45 = sphi 0, %s44
      %s61 = sphi 0, %s45
      %s69 = sphi 0, %s71
      %s72 = sphi 0, %s69
      %s73 = sphi 0, %s72
      %s89 = sphi 0, %s73
      %s97 = sphi 0, %s99
      %s100 = sphi 0, %s97
      %s101 = sphi 0, %s100
      %s117 = sphi 0, %s101
    $region4: #{tpu_custom_call.1} parent=1 // loop_header_branch
      %20 = sbr.rel (%p18) target = $region8
    $region5: #{tpu_custom_call.1} parent=1 // loop_body
      %s22 = ssub.s32 %s17, 1
      %s23 = ssub.s32 %s17, 2
      %s30 = sadd.s32 1, %s25
      %p31 = scmp.ge.s32.totalorder %s30, 1
      %s32 = scalar_select %p31, 0, %s30
      %s33 = sadd.s32 1, %s24
      %s34 = scalar_select %p31, %s33, %s24
      %p35 = scmp.ge.s32.totalorder %s34, 2
      %s36 = scalar_select %p35, 0, %s34
      %s37 = ssub.s32 %s24, %s36
      %s38 = ssub.s32 %s25, %s32
      %s39 = sor.u32 %s37, %s38
      %p40 = scmp.eq.s32.totalorder %s39, 0
      %s42 = sadd.s32 %s41, 1
      %s43 = scalar_select %p40, %s41, %s42
      %p46 = pneg %p40
      %p47 = scmp.eq.s32.totalorder %s17, 1
      %p48 = por %p46, %p47
      %p49 = scmp.ne.s32.totalorder %s41, %s44
      %p50 = scmp.eq.s32.totalorder %s17, 0
      %p51 = por %p49, %p50
      %p52 = scmp.ne.s32.totalorder %s41, %s44
      %p53 = scmp.eq.s32.totalorder %s22, 1
      %p54 = por %p52, %p53
      %p55 = scmp.ne.s32.totalorder %s44, %s45
      %p56 = scmp.eq.s32.totalorder %s22, 0
      %p57 = por %p55, %p56
      %p58 = scmp.ne.s32.totalorder %s44, %s45
      %p59 = scmp.eq.s32.totalorder %s23, 1
      %p60 = por %p58, %p59
      %p62 = scmp.ne.s32.totalorder %s45, %s61
      %p63 = scmp.eq.s32.totalorder %s23, 0
      %p64 = por %p62, %p63
      %s65 = ssub.s32 %s24, %s36
      %s66 = ssub.s32 %s25, %s32
      %s67 = sor.u32 %s65, %s66
      %p68 = scmp.eq.s32.totalorder %s67, 0
      %s70 = sadd.s32 %s69, 1
      %s71 = scalar_select %p68, %s69, %s70
      %p74 = pneg %p68
      %p75 = scmp.eq.s32.totalorder %s17, 1
      %p76 = por %p74, %p75
      %p77 = scmp.ne.s32.totalorder %s69, %s72
      %p78 = scmp.eq.s32.totalorder %s17, 0
      %p79 = por %p77, %p78
      %p80 = scmp.ne.s32.totalorder %s69, %s72
      %p81 = scmp.eq.s32.totalorder %s22, 1
      %p82 = por %p80, %p81
      %p83 = scmp.ne.s32.totalorder %s72, %s73
      %p84 = scmp.eq.s32.totalorder %s22, 0
      %p85 = por %p83, %p84
      %p86 = scmp.ne.s32.totalorder %s72, %s73
      %p87 = scmp.eq.s32.totalorder %s23, 1
      %p88 = por %p86, %p87
      %p90 = scmp.ne.s32.totalorder %s73, %s89
      %p91 = scmp.eq.s32.totalorder %s23, 0
      %p92 = por %p90, %p91
      %s93 = ssub.s32 %s24, %s36
      %s94 = ssub.s32 %s25, %s32
      %s95 = sor.u32 %s93, %s94
      %p96 = scmp.eq.s32.totalorder %s95, 0
      %s98 = sadd.s32 %s97, 1
      %s99 = scalar_select %p96, %s97, %s98
      %p102 = pneg %p96
      %p103 = scmp.eq.s32.totalorder %s17, 1
      %p104 = por %p102, %p103
      %p105 = scmp.ne.s32.totalorder %s97, %s100
      %p106 = scmp.eq.s32.totalorder %s17, 0
      %p107 = por %p105, %p106
      %p108 = scmp.ne.s32.totalorder %s97, %s100
      %p109 = scmp.eq.s32.totalorder %s22, 1
      %p110 = por %p108, %p109
      %p111 = scmp.ne.s32.totalorder %s100, %s101
      %p112 = scmp.eq.s32.totalorder %s22, 0
      %p113 = por %p111, %p112
      %p114 = scmp.ne.s32.totalorder %s100, %s101
      %p115 = scmp.eq.s32.totalorder %s23, 1
      %p116 = por %p114, %p115
      %p118 = scmp.ne.s32.totalorder %s101, %s117
      %p119 = scmp.eq.s32.totalorder %s23, 0
      %p120 = por %p118, %p119
      %p121 = scmp.le.s32.totalorder 1, %s17
      %p122 = scmp.lt.s32.totalorder %s17, 3
      %p123 = pnand %p121, %p122
      %p124 = pneg %p123
      // Predicated region
      $region9: #{tpu_custom_call.1} parent=5 // pred_check
        _
      $region10: #{tpu_custom_call.1} parent=5 // pred_check_branch
        %126 = sbr.rel (%p123) target = $region12
      $region11: #{tpu_custom_call.1} parent=5 // pred_region
        %s127 = ssub.s32 %s17, 1
      $region12: #{tpu_custom_call.1} parent=5 // pred_fallthru
        _
      %p128 = scmp.lt.s32.totalorder %s17, 2
      // Predicated region
      $region13: #{tpu_custom_call.1} parent=5 // pred_check
        %p129 = pneg %p128
      $region14: #{tpu_custom_call.1} parent=5 // pred_check_branch
        %131 = sbr.rel (%p129) target = $region16
      $region15: #{tpu_custom_call.1} parent=5 // pred_region
        // Predicated region
        $region17: #{tpu_custom_call.1} parent=15 // pred_check
          %p132 = pneg %p51
        $region18: #{tpu_custom_call.1} parent=15 // pred_check_branch
          %134 = sbr.rel (%p132) target = $region20
        $region19: #{tpu_custom_call.1} parent=15 // pred_region
          %s135 = sand.u32 %s41, 1
          %s136 = scalar_lea.sflag [#allocation3], %s135
          %s137 = sand.u32 %s41, 1
          %s138 = smul.addr %s137, 32
          %s139 = scalar_lea.vmem [#allocation2], %s138
          %s140 = smul.u32 2, %s25
          %s142 = ssub.s32 512, 512
          %143 = vsyncadd %s136, %s142
          %s144 = smul.addr %s24, 4
          %s145 = sadd.s32 %s140, %s144
          %s146 = smul.addr %s145, 128
          %s147 = scalar_lea.hbm %s0, %s146
          %s148 = sshll.u32 %s139, 4
          %s149 = int_to_ptr.vmem [resolvable:$true] %s148
          %154 = dma.hbm_to_vmem [thread:$0]  %s147, 512, %s149, %s136, 256, 256, 16
        $region20: #{tpu_custom_call.1} parent=15 // pred_fallthru
          _
        // Predicated region
        $region21: #{tpu_custom_call.1} parent=15 // pred_check
          %p155 = pneg %p79
        $region22: #{tpu_custom_call.1} parent=15 // pred_check_branch
          %157 = sbr.rel (%p155) target = $region24
        $region23: #{tpu_custom_call.1} parent=15 // pred_region
          %s158 = sand.u32 %s69, 1
          %s159 = scalar_lea.sflag [#allocation6], %s158
          %s160 = sand.u32 %s69, 1
          %s161 = smul.addr %s160, 32
          %s162 = scalar_lea.vmem [#allocation5], %s161
          %s163 = smul.u32 2, %s25
          %s165 = ssub.s32 512, 512
          %166 = vsyncadd %s159, %s165
          %s167 = smul.addr %s24, 4
          %s168 = sadd.s32 %s163, %s167
          %s169 = smul.addr %s168, 128
          %s170 = scalar_lea.hbm %s1, %s169
          %s171 = sshll.u32 %s162, 4
          %s172 = int_to_ptr.vmem [resolvable:$true] %s171
          %177 = dma.hbm_to_vmem [thread:$0]  %s170, 512, %s172, %s159, 256, 256, 16
        $region24: #{tpu_custom_call.1} parent=15 // pred_fallthru
          _
      $region16: #{tpu_custom_call.1} parent=5 // pred_fallthru
        _
      %p178 = scmp.le.s32.totalorder 1, %s17
      %p179 = scmp.lt.s32.totalorder %s17, 3
      %p180 = pnand %p178, %p179
      %p181 = pneg %p180
      // Predicated region
      $region25: #{tpu_custom_call.1} parent=5 // pred_check
        _
      $region26: #{tpu_custom_call.1} parent=5 // pred_check_branch
        %183 = sbr.rel (%p180) target = $region28
      $region27: #{tpu_custom_call.1} parent=5 // pred_region
        %s184 = ssub.s32 %s17, 1
        %s185 = sand.u32 %s44, 1
        %s186 = scalar_lea.sflag [#allocation3], %s185
        %s187 = sand.u32 %s44, 1
        %s188 = smul.addr %s187, 32
        %s189 = scalar_lea.vmem [#allocation2], %s188
        // Predicated region
        $region29: #{tpu_custom_call.1} parent=27 // pred_check
          %p190 = pneg %p57
        $region30: #{tpu_custom_call.1} parent=27 // pred_check_branch
          %192 = sbr.rel (%p190) target = $region32
        $region31: #{tpu_custom_call.1} parent=27 // pred_region
          %193 = dma.done %s186, 512
        $region32: #{tpu_custom_call.1} parent=27 // pred_fallthru
          _
        %s194 = sand.u32 %s72, 1
        %s195 = scalar_lea.sflag [#allocation6], %s194
        %s196 = sand.u32 %s72, 1
        %s197 = smul.addr %s196, 32
        %s198 = scalar_lea.vmem [#allocation5], %s197
        // Predicated region
        $region33: #{tpu_custom_call.1} parent=27 // pred_check
          %p199 = pneg %p85
        $region34: #{tpu_custom_call.1} parent=27 // pred_check_branch
          %201 = sbr.rel (%p199) target = $region36
        $region35: #{tpu_custom_call.1} parent=27 // pred_region
          %202 = dma.done %s195, 512
        $region36: #{tpu_custom_call.1} parent=27 // pred_fallthru
          _
        %s203 = sand.u32 %s44, 1
        %s204 = scalar_lea.sflag [#allocation3], %s203
        %s205 = sand.u32 %s44, 1
        %s206 = smul.addr %s205, 32
        %s207 = scalar_lea.vmem [#allocation2], %s206
        %p208 = pneg %p57
        %p209 = pneg %p54
        %s210 = sand.u32 %s72, 1
        %s211 = scalar_lea.sflag [#allocation6], %s210
        %s212 = sand.u32 %s72, 1
        %s213 = smul.addr %s212, 32
        %s214 = scalar_lea.vmem [#allocation5], %s213
        %p215 = pneg %p85
        %p216 = pneg %p82
        %p217 = pneg %p113
        %p218 = pneg %p110
        %s219 = sand.u32 %s100, 1
        %s220 = scalar_lea.sflag [#allocation4], %s219
        %s221 = sand.u32 %s100, 1
        %s222 = smul.addr %s221, 32
        %s223 = scalar_lea.vmem [#allocation7], %s222
        %s224 = smul.u32 2, %s27
        %s225 = smul.u32 2, %s27
        %s226 = smul.u32 2, %s27
        %v227 = vld [vmem:[%s198] sm:$0xf]
        %v228 = vld [vmem:[%s198 + $0x8] sm:$0xf]
        %v229 = vadd.f32 %v227, 1e-06
        %v230 = vadd.f32 %v228, 1e-06
        %vm231 = vcmask 1043456
        %v232 = vsel %vm231, %v229, 0.0
        %v233 = vrot.slane %v232, 4
        %v234 = vadd.f32 %v232, %v233
        %v235 = vrot.slane %v234, 2
        %v236 = vadd.f32 %v234, %v235
        %v237 = vrot.slane %v236, 1
        %v238 = vadd.f32 %v236, %v237
        %v239 = vsel %vm231, %v230, 0.0
        %v240 = vrot.slane %v239, 4
        %v241 = vadd.f32 %v239, %v240
        %v242 = vrot.slane %v241, 2
        %v243 = vadd.f32 %v241, %v242
        %v244 = vrot.slane %v243, 1
        %v245 = vadd.f32 %v243, %v244
        %v246 = vld [vmem:[%s189] sm:$0xf]
        %v247 = vld [vmem:[%s189 + $0x8] sm:$0xf]
        %v248 = vlaneseq
        %v249 = vshrl.u32 %v248, 7
        %v250 = vsub.s32 0, %v249
        %v251 = vrot.slane %v229, %v250
        %v252 = vlaneseq
        %v253 = vshrl.u32 %v252, 7
        %v254 = vsub.s32 0, %v253
        %v255 = vrot.slane %v230, %v254
        %v256 = vmul.f32 %v251, %v246
        %v257 = vmul.f32 %v255, %v247
        %v258 = vld [vmem:[%s189] sm:$0xf0]
        %v259 = vld [vmem:[%s189 + $0x8] sm:$0xf0]
        %v260 = vlaneseq
        %v261 = vshrl.u32 %v260, 7
        %v262 = vsub.s32 1, %v261
        %v263 = vrot.slane %v229, %v262
        %v264 = vlaneseq
        %v265 = vshrl.u32 %v264, 7
        %v266 = vsub.s32 1, %v265
        %v267 = vrot.slane %v230, %v266
        %v268 = vmul.f32 %v263, %v258
        %v269 = vmul.f32 %v267, %v259
        %v272 = vrot.slane %v268, 4
        %v273 = vrot.slane %v269, 4
        %v276 = vadd.f32 %v256, %v272
        %v277 = vadd.f32 %v257, %v273
        %v278 = vld [vmem:[%s189 + $0x10] sm:$0xf]
        %v279 = vld [vmem:[%s189 + $0x18] sm:$0xf]
        %v280 = vlaneseq
        %v281 = vshrl.u32 %v280, 7
        %v282 = vsub.s32 2, %v281
        %v283 = vrot.slane %v229, %v282
        %v284 = vlaneseq
        %v285 = vshrl.u32 %v284, 7
        %v286 = vsub.s32 2, %v285
        %v287 = vrot.slane %v230, %v286
        %v288 = vmul.f32 %v283, %v278
        %v289 = vmul.f32 %v287, %v279
        %v290 = vadd.f32 %v276, %v288
        %v291 = vadd.f32 %v277, %v289
        %v292 = vld [vmem:[%s189 + $0x10] sm:$0xf0]
        %v293 = vld [vmem:[%s189 + $0x18] sm:$0xf0]
        %v294 = vlaneseq
        %v295 = vshrl.u32 %v294, 7
        %v296 = vsub.s32 3, %v295
        %v297 = vrot.slane %v229, %v296
        %v298 = vlaneseq
        %v299 = vshrl.u32 %v298, 7
        %v300 = vsub.s32 3, %v299
        %v301 = vrot.slane %v230, %v300
        %v302 = vmul.f32 %v297, %v292
        %v303 = vmul.f32 %v301, %v293
        %v306 = vrot.slane %v302, 4
        %v307 = vrot.slane %v303, 4
        %v310 = vadd.f32 %v290, %v306
        %v311 = vadd.f32 %v291, %v307
        %v312 = vrcp.pop %v238
        %v313 = vmul.f32 1.0, %v312
        %v314 = vrcp.pop %v245
        %v315 = vmul.f32 1.0, %v314
        %v316 = vmul.f32 %v310, %v313
        %v317 = vmul.f32 %v311, %v315
        %318 = vst [vmem:[%s223] sm:$0xf] %v316
        %319 = vst [vmem:[%s223 + $0x8] sm:$0xf] %v317
        %v320 = vld [vmem:[%s198] sm:$0xf0]
        %v321 = vld [vmem:[%s198 + $0x8] sm:$0xf0]
        %v322 = vadd.f32 %v320, 1e-06
        %v323 = vadd.f32 %v321, 1e-06
        %v326 = vrot.slane %v322, 4
        %v327 = vrot.slane %v323, 4
        %v330 = vsel %vm231, %v326, 0.0
        %v331 = vrot.slane %v330, 4
        %v332 = vadd.f32 %v330, %v331
        %v333 = vrot.slane %v332, 2
        %v334 = vadd.f32 %v332, %v333
        %v335 = vrot.slane %v334, 1
        %v336 = vadd.f32 %v334, %v335
        %v337 = vsel %vm231, %v327, 0.0
        %v338 = vrot.slane %v337, 4
        %v339 = vadd.f32 %v337, %v338
        %v340 = vrot.slane %v339, 2
        %v341 = vadd.f32 %v339, %v340
        %v342 = vrot.slane %v341, 1
        %v343 = vadd.f32 %v341, %v342
        %v344 = vld [vmem:[%s189] sm:$0xf]
        %v345 = vld [vmem:[%s189 + $0x8] sm:$0xf]
        %v346 = vlaneseq
        %v347 = vshrl.u32 %v346, 7
        %v348 = vsub.s32 4, %v347
        %v349 = vrot.slane %v322, %v348
        %v350 = vlaneseq
        %v351 = vshrl.u32 %v350, 7
        %v352 = vsub.s32 4, %v351
        %v353 = vrot.slane %v323, %v352
        %v354 = vmul.f32 %v349, %v344
        %v355 = vmul.f32 %v353, %v345
        %v356 = vld [vmem:[%s189] sm:$0xf0]
        %v357 = vld [vmem:[%s189 + $0x8] sm:$0xf0]
        %v358 = vlaneseq
        %v359 = vshrl.u32 %v358, 7
        %v360 = vsub.s32 5, %v359
        %v361 = vrot.slane %v322, %v360
        %v362 = vlaneseq
        %v363 = vshrl.u32 %v362, 7
        %v364 = vsub.s32 5, %v363
        %v365 = vrot.slane %v323, %v364
        %v366 = vmul.f32 %v361, %v356
        %v367 = vmul.f32 %v365, %v357
        %v370 = vrot.slane %v366, 4
        %v371 = vrot.slane %v367, 4
        %v374 = vadd.f32 %v354, %v370
        %v375 = vadd.f32 %v355, %v371
        %v376 = vld [vmem:[%s189 + $0x10] sm:$0xf]
        %v377 = vld [vmem:[%s189 + $0x18] sm:$0xf]
        %v378 = vlaneseq
        %v379 = vshrl.u32 %v378, 7
        %v380 = vsub.s32 6, %v379
        %v381 = vrot.slane %v322, %v380
        %v382 = vlaneseq
        %v383 = vshrl.u32 %v382, 7
        %v384 = vsub.s32 6, %v383
        %v385 = vrot.slane %v323, %v384
        %v386 = vmul.f32 %v381, %v376
        %v387 = vmul.f32 %v385, %v377
        %v388 = vadd.f32 %v374, %v386
        %v389 = vadd.f32 %v375, %v387
        %v390 = vld [vmem:[%s189 + $0x10] sm:$0xf0]
        %v391 = vld [vmem:[%s189 + $0x18] sm:$0xf0]
        %v392 = vlaneseq
        %v393 = vshrl.u32 %v392, 7
        %v394 = vsub.s32 7, %v393
        %v395 = vrot.slane %v322, %v394
        %v396 = vlaneseq
        %v397 = vshrl.u32 %v396, 7
        %v398 = vsub.s32 7, %v397
        %v399 = vrot.slane %v323, %v398
        %v400 = vmul.f32 %v395, %v390
        %v401 = vmul.f32 %v399, %v391
        %v404 = vrot.slane %v400, 4
        %v405 = vrot.slane %v401, 4
        %v408 = vadd.f32 %v388, %v404
        %v409 = vadd.f32 %v389, %v405
        %v410 = vrcp.pop %v336
        %v411 = vmul.f32 1.0, %v410
        %v412 = vrcp.pop %v343
        %v413 = vmul.f32 1.0, %v412
        %v414 = vmul.f32 %v408, %v411
        %v415 = vmul.f32 %v409, %v413
        %v418 = vrot.slane %v414, 4
        %v419 = vrot.slane %v415, 4
        %422 = vst [vmem:[%s223] sm:$0xf0] %v418
        %423 = vst [vmem:[%s223 + $0x8] sm:$0xf0] %v419
        %v424 = vld [vmem:[%s198 + $0x10] sm:$0xf]
        %v425 = vld [vmem:[%s198 + $0x18] sm:$0xf]
        %v426 = vadd.f32 %v424, 1e-06
        %v427 = vadd.f32 %v425, 1e-06
        %v428 = vsel %vm231, %v426, 0.0
        %v429 = vrot.slane %v428, 4
        %v430 = vadd.f32 %v428, %v429
        %v431 = vrot.slane %v430, 2
        %v432 = vadd.f32 %v430, %v431
        %v433 = vrot.slane %v432, 1
        %v434 = vadd.f32 %v432, %v433
        %v435 = vsel %vm231, %v427, 0.0
        %v436 = vrot.slane %v435, 4
        %v437 = vadd.f32 %v435, %v436
        %v438 = vrot.slane %v437, 2
        %v439 = vadd.f32 %v437, %v438
        %v440 = vrot.slane %v439, 1
        %v441 = vadd.f32 %v439, %v440
        %v442 = vld [vmem:[%s189] sm:$0xf]
        %v443 = vld [vmem:[%s189 + $0x8] sm:$0xf]
        %v444 = vlaneseq
        %v445 = vshrl.u32 %v444, 7
        %v446 = vsub.s32 0, %v445
        %v447 = vrot.slane %v426, %v446
        %v448 = vlaneseq
        %v449 = vshrl.u32 %v448, 7
        %v450 = vsub.s32 0, %v449
        %v451 = vrot.slane %v427, %v450
        %v452 = vmul.f32 %v447, %v442
        %v453 = vmul.f32 %v451, %v443
        %v454 = vld [vmem:[%s189] sm:$0xf0]
        %v455 = vld [vmem:[%s189 + $0x8] sm:$0xf0]
        %v456 = vlaneseq
        %v457 = vshrl.u32 %v456, 7
        %v458 = vsub.s32 1, %v457
        %v459 = vrot.slane %v426, %v458
        %v460 = vlaneseq
        %v461 = vshrl.u32 %v460, 7
        %v462 = vsub.s32 1, %v461
        %v463 = vrot.slane %v427, %v462
        %v464 = vmul.f32 %v459, %v454
        %v465 = vmul.f32 %v463, %v455
        %v468 = vrot.slane %v464, 4
        %v469 = vrot.slane %v465, 4
        %v472 = vadd.f32 %v452, %v468
        %v473 = vadd.f32 %v453, %v469
        %v474 = vld [vmem:[%s189 + $0x10] sm:$0xf]
        %v475 = vld [vmem:[%s189 + $0x18] sm:$0xf]
        %v476 = vlaneseq
        %v477 = vshrl.u32 %v476, 7
        %v478 = vsub.s32 2, %v477
        %v479 = vrot.slane %v426, %v478
        %v480 = vlaneseq
        %v481 = vshrl.u32 %v480, 7
        %v482 = vsub.s32 2, %v481
        %v483 = vrot.slane %v427, %v482
        %v484 = vmul.f32 %v479, %v474
        %v485 = vmul.f32 %v483, %v475
        %v486 = vadd.f32 %v472, %v484
        %v487 = vadd.f32 %v473, %v485
        %v488 = vld [vmem:[%s189 + $0x10] sm:$0xf0]
        %v489 = vld [vmem:[%s189 + $0x18] sm:$0xf0]
        %v490 = vlaneseq
        %v491 = vshrl.u32 %v490, 7
        %v492 = vsub.s32 3, %v491
        %v493 = vrot.slane %v426, %v492
        %v494 = vlaneseq
        %v495 = vshrl.u32 %v494, 7
        %v496 = vsub.s32 3, %v495
        %v497 = vrot.slane %v427, %v496
        %v498 = vmul.f32 %v493, %v488
        %v499 = vmul.f32 %v497, %v489
        %v502 = vrot.slane %v498, 4
        %v503 = vrot.slane %v499, 4
        %v506 = vadd.f32 %v486, %v502
        %v507 = vadd.f32 %v487, %v503
        %v508 = vrcp.pop %v434
        %v509 = vmul.f32 1.0, %v508
        %v510 = vrcp.pop %v441
        %v511 = vmul.f32 1.0, %v510
        %v512 = vmul.f32 %v506, %v509
        %v513 = vmul.f32 %v507, %v511
        %514 = vst [vmem:[%s223 + $0x10] sm:$0xf] %v512
        %515 = vst [vmem:[%s223 + $0x18] sm:$0xf] %v513
        %v516 = vld [vmem:[%s198 + $0x10] sm:$0xf0]
        %v517 = vld [vmem:[%s198 + $0x18] sm:$0xf0]
        %v518 = vadd.f32 %v516, 1e-06
        %v519 = vadd.f32 %v517, 1e-06
        %v522 = vrot.slane %v518, 4
        %v523 = vrot.slane %v519, 4
        %v526 = vsel %vm231, %v522, 0.0
        %v527 = vrot.slane %v526, 4
        %v528 = vadd.f32 %v526, %v527
        %v529 = vrot.slane %v528, 2
        %v530 = vadd.f32 %v528, %v529
        %v531 = vrot.slane %v530, 1
        %v532 = vadd.f32 %v530, %v531
        %v533 = vsel %vm231, %v523, 0.0
        %v534 = vrot.slane %v533, 4
        %v535 = vadd.f32 %v533, %v534
        %v536 = vrot.slane %v535, 2
        %v537 = vadd.f32 %v535, %v536
        %v538 = vrot.slane %v537, 1
        %v539 = vadd.f32 %v537, %v538
        %v540 = vld [vmem:[%s189] sm:$0xf]
        %v541 = vld [vmem:[%s189 + $0x8] sm:$0xf]
        %v542 = vlaneseq
        %v543 = vshrl.u32 %v542, 7
        %v544 = vsub.s32 4, %v543
        %v545 = vrot.slane %v518, %v544
        %v546 = vlaneseq
        %v547 = vshrl.u32 %v546, 7
        %v548 = vsub.s32 4, %v547
        %v549 = vrot.slane %v519, %v548
        %v550 = vmul.f32 %v545, %v540
        %v551 = vmul.f32 %v549, %v541
        %v552 = vld [vmem:[%s189] sm:$0xf0]
        %v553 = vld [vmem:[%s189 + $0x8] sm:$0xf0]
        %v554 = vlaneseq
        %v555 = vshrl.u32 %v554, 7
        %v556 = vsub.s32 5, %v555
        %v557 = vrot.slane %v518, %v556
        %v558 = vlaneseq
        %v559 = vshrl.u32 %v558, 7
        %v560 = vsub.s32 5, %v559
        %v561 = vrot.slane %v519, %v560
        %v562 = vmul.f32 %v557, %v552
        %v563 = vmul.f32 %v561, %v553
        %v566 = vrot.slane %v562, 4
        %v567 = vrot.slane %v563, 4
        %v570 = vadd.f32 %v550, %v566
        %v571 = vadd.f32 %v551, %v567
        %v572 = vld [vmem:[%s189 + $0x10] sm:$0xf]
        %v573 = vld [vmem:[%s189 + $0x18] sm:$0xf]
        %v574 = vlaneseq
        %v575 = vshrl.u32 %v574, 7
        %v576 = vsub.s32 6, %v575
        %v577 = vrot.slane %v518, %v576
        %v578 = vlaneseq
        %v579 = vshrl.u32 %v578, 7
        %v580 = vsub.s32 6, %v579
        %v581 = vrot.slane %v519, %v580
        %v582 = vmul.f32 %v577, %v572
        %v583 = vmul.f32 %v581, %v573
        %v584 = vadd.f32 %v570, %v582
        %v585 = vadd.f32 %v571, %v583
        %v586 = vld [vmem:[%s189 + $0x10] sm:$0xf0]
        %v587 = vld [vmem:[%s189 + $0x18] sm:$0xf0]
        %v588 = vlaneseq
        %v589 = vshrl.u32 %v588, 7
        %v590 = vsub.s32 7, %v589
        %v591 = vrot.slane %v518, %v590
        %v592 = vlaneseq
        %v593 = vshrl.u32 %v592, 7
        %v594 = vsub.s32 7, %v593
        %v595 = vrot.slane %v519, %v594
        %v596 = vmul.f32 %v591, %v586
        %v597 = vmul.f32 %v595, %v587
        %v600 = vrot.slane %v596, 4
        %v601 = vrot.slane %v597, 4
        %v604 = vadd.f32 %v584, %v600
        %v605 = vadd.f32 %v585, %v601
        %v606 = vrcp.pop %v532
        %v607 = vmul.f32 1.0, %v606
        %v608 = vrcp.pop %v539
        %v609 = vmul.f32 1.0, %v608
        %v610 = vmul.f32 %v604, %v607
        %v611 = vmul.f32 %v605, %v609
        %v614 = vrot.slane %v610, 4
        %v615 = vrot.slane %v611, 4
        %618 = vst [vmem:[%s223 + $0x10] sm:$0xf0] %v614
        %619 = vst [vmem:[%s223 + $0x18] sm:$0xf0] %v615
        %s620 = sand.u32 %s100, 1
        %s621 = scalar_lea.sflag [#allocation4], %s620
        %s622 = sand.u32 %s100, 1
        %s623 = smul.addr %s622, 32
        %s624 = scalar_lea.vmem [#allocation7], %s623
        // Predicated region
        $region37: #{tpu_custom_call.1} parent=27 // pred_check
          %p625 = pneg %p110
        $region38: #{tpu_custom_call.1} parent=27 // pred_check_branch
          %627 = sbr.rel (%p625) target = $region40
        $region39: #{tpu_custom_call.1} parent=27 // pred_region
          %s628 = smul.u32 2, %s27
          %s630 = ssub.s32 512, 512
          %631 = vsyncadd %s621, %s630
          %s632 = smul.addr %s26, 4
          %s633 = sadd.s32 %s628, %s632
          %s634 = smul.addr %s633, 128
          %s635 = scalar_lea.hbm %s2, %s634
          %s636 = sshll.u32 %s624, 4
          %s637 = int_to_ptr.vmem [resolvable:$true] %s636
          %642 = dma.vmem_to_hbm [thread:$0]  %s637, 512, %s635, %s621, 256, 256, 16
        $region40: #{tpu_custom_call.1} parent=27 // pred_fallthru
          _
      $region28: #{tpu_custom_call.1} parent=5 // pred_fallthru
        _
      %p643 = scmp.le.s32.totalorder 2, %s17
      // Predicated region
      $region41: #{tpu_custom_call.1} parent=5 // pred_check
        %p644 = pneg %p643
      $region42: #{tpu_custom_call.1} parent=5 // pred_check_branch
        %646 = sbr.rel (%p644) target = $region44
      $region43: #{tpu_custom_call.1} parent=5 // pred_region
        %s647 = ssub.s32 %s17, 2
        // Predicated region
        $region45: #{tpu_custom_call.1} parent=43 // pred_check
          %p648 = pneg %p116
        $region46: #{tpu_custom_call.1} parent=43 // pred_check_branch
          %650 = sbr.rel (%p648) target = $region48
        $region47: #{tpu_custom_call.1} parent=43 // pred_region
          %s651 = sand.u32 %s101, 1
          %s652 = scalar_lea.sflag [#allocation4], %s651
          %s653 = sand.u32 %s101, 1
          %s654 = smul.addr %s653, 32
          %s655 = scalar_lea.vmem [#allocation7], %s654
          %656 = dma.done %s652, 512
        $region48: #{tpu_custom_call.1} parent=43 // pred_fallthru
          _
      $region44: #{tpu_custom_call.1} parent=5 // pred_fallthru
        _
    $region6: #{tpu_custom_call.1} parent=1 // loop_footer
      %s21 = sadd.s32 1, %s17
    $region7: #{tpu_custom_call.1} parent=1 // loop_footer_branch
      %16 = sbr.rel target = $region3
    $region8: #{tpu_custom_call.1} parent=1 // loop_exit
      _
    %657 = vsyncpa [#allocation3], 1
    %s658 = scalar_lea.sflag [#allocation3], 1
    %659 = vsyncpa %s658, 1
    %660 = vsyncpa [#allocation6], 1
    %s661 = scalar_lea.sflag [#allocation6], 1
    %662 = vsyncpa %s661, 1
    %663 = vsyncpa [#allocation4], 1
    %s664 = scalar_lea.sflag [#allocation4], 1
    %665 = vsyncpa %s664, 1

</llo_original>
